<compile_context>
chip_gen: v7x
topology: tpu7x:2x2x1
jax: 0.10.0
libtpu: 0.0.40
codegen_flags: <defaults>
</compile_context>

<pallas_src>
import jax
import jax.numpy as jnp
from jax import lax
from jax.experimental import pallas as pl
from jax.experimental.pallas import tpu as pltpu


def _tensorcores_per_chip() -> int:
    """2 TensorCores per chip on v7x, 1 on v5e/v6e (conservative default)."""
    try:
        kind = jax.devices()[0].device_kind.lower()
    except Exception:
        return 1
    return 2 if "v7" in kind else 1


def _make_mae_kernel(tm, lane, valid_rows, steps_per_core, need_mask, compute_dt):
    """Kernel factory closing over static tiling parameters.

    steps_per_core is None for the single-grid-axis (one TensorCore) variant.
    """
    two_axes = steps_per_core is not None

    def _block_partial(ad):
        # (tm, lane) -> (8, lane) per-sublane/lane partial sums; widening to
        # f32 happens at the accumulating adds. Leading-dim reshape only (last
        # dim untouched), so no relayout copy is introduced.
        return jnp.sum(ad.reshape(tm // 8, 8, lane), axis=0, dtype=jnp.float32)

    def kernel(inpt_ref, tgt_ref, out_ref):
        if two_axes:
            c = pl.program_id(0)            # CORE_PARALLEL axis (v7x)
            k = pl.program_id(1)            # reduction axis
            row_base = (c * steps_per_core + k) * tm
        else:
            k = pl.program_id(0)            # reduction axis
            row_base = k * tm

        # Output block is resident across k: init once (per core).
        @pl.when(k == 0)
        def _init():
            out_ref[...] = jnp.zeros_like(out_ref)

        # HBM reads stay in the native input dtype; sub/abs run in compute_dt
        # (native bf16/f16 on chips with a bf16 VPU, f32 otherwise).
        x = inpt_ref[...]
        y = tgt_ref[...]
        if x.dtype != compute_dt:
            x = x.astype(compute_dt)
        if y.dtype != compute_dt:
            y = y.astype(compute_dt)
        ad = jnp.abs(y - x)

        if need_mask:
            is_edge = row_base + tm > valid_rows

            @pl.when(jnp.logical_not(is_edge))
            def _interior():
                # Interior blocks: no iota/compare/where work at all.
                out_ref[...] += _block_partial(ad)

            @pl.when(is_edge)
            def _edge():
                rows = lax.broadcasted_iota(jnp.int32, (tm, lane), 0) + row_base
                # NOTE: keep this a select (jnp.where). Rows read past the
                # array end contain unspecified data (possibly NaN/Inf); a
                # multiply-by-mask would poison the sum.
                ad_m = jnp.where(rows < valid_rows, ad, jnp.zeros_like(ad))
                out_ref[...] += _block_partial(ad_m)
        else:
            out_ref[...] += _block_partial(ad)

    return kernel


def mae_loss(inpt: jax.Array, tgt: jax.Array, *,
             block_bytes: int = 2 * 1024 * 1024,
             num_cores: int | None = None) -> jax.Array:
    """mean(|tgt - inpt|), computed in a Pallas TPU kernel."""
    assert inpt.shape == tgt.shape, "inpt/tgt must have identical shapes"
    n_elem = int(inpt.size)

    out_dt = jnp.result_type(inpt.dtype, tgt.dtype)
    if not jnp.issubdtype(out_dt, jnp.floating):
        out_dt = jnp.dtype(jnp.float32)     # keep the mean a float for int inputs
    if n_elem == 0:
        return jnp.array(jnp.nan, dtype=out_dt)

    lane = 128
    m_rows = n_elem // lane                 # full 128-wide rows
    tail = n_elem - m_rows * lane           # < 128 leftover elements
    assert m_rows < 2 ** 31, "row index would overflow int32"

    flat_i = inpt.reshape(-1)
    flat_t = tgt.reshape(-1)

    # Tiny tail (< 128 elements) summed in plain JAX: avoids the jnp.pad full
    # second HBM copy of both inputs for non-multiple-of-128 sizes.
    tail_sum = jnp.zeros((), jnp.float32)
    if tail:
        ti = flat_i[m_rows * lane:].astype(jnp.float32)
        tt = flat_t[m_rows * lane:].astype(jnp.float32)
        tail_sum = jnp.sum(jnp.abs(tt - ti))

    if m_rows == 0:
        total = tail_sum                    # degenerate: fewer than 128 elements
    else:
        if tail:
            # One bounded copy of the 128-aligned bulk only (no full pad).
            a = flat_i[: m_rows * lane].reshape(m_rows, lane)
            b = flat_t[: m_rows * lane].reshape(m_rows, lane)
        else:
            a = flat_i.reshape(m_rows, lane)    # free reshape of contiguous data
            b = flat_t.reshape(m_rows, lane)

        # Compute dtype: native bf16/f16 sub/abs (widened to f32 only in the
        # accumulating reduce); everything else runs in f32.
        in_dt = jnp.result_type(inpt.dtype, tgt.dtype)
        if in_dt == jnp.bfloat16 or in_dt == jnp.float16:
            compute_dt = jnp.dtype(in_dt)
        else:
            compute_dt = jnp.dtype(jnp.float32)

        # Rows per block: ~block_bytes of HBM-side bytes per input block,
        # rounded to the packed-sublane native tile (8 f32 / 16 bf16 / 32 i8).
        isz_max = max(jnp.dtype(inpt.dtype).itemsize, jnp.dtype(tgt.dtype).itemsize)
        isz_min = min(jnp.dtype(inpt.dtype).itemsize, jnp.dtype(tgt.dtype).itemsize)
        pack = 8 * max(1, 4 // isz_min)
        tm = max(pack, (block_bytes // (lane * isz_max)) // pack * pack)
        tm = min(tm, pl.cdiv(m_rows, pack) * pack)

        steps_total = pl.cdiv(m_rows, tm)

        if num_cores is None:
            num_cores = _tensorcores_per_chip()
        num_cores = 2 if (num_cores >= 2 and steps_total >= 2) else 1

        if num_cores == 2:
            # Genuine 2-TensorCore split (v7x): leading CORE_PARALLEL axis.
            steps_per_core = pl.cdiv(steps_total, 2)
            need_mask = (2 * steps_per_core * tm) != m_rows
            grid = (2, steps_per_core)

            def in_index(c, k):
                # Over-covering (c, k) pairs re-read the last real block; their
                # contribution is masked to zero inside the kernel.
                return (jnp.minimum(c * steps_per_core + k, steps_total - 1), 0)

            def out_index(c, k):
                return (c, 0)

            out_rows = 2 * 8
            dim_sem = (pltpu.CORE_PARALLEL, pltpu.ARBITRARY)
            kernel = _make_mae_kernel(tm, lane, m_rows, steps_per_core,
                                      need_mask, compute_dt)
        else:
            # Single TensorCore (v5e/v6e): one reduction axis, resident output.
            need_mask = (steps_total * tm) != m_rows
            grid = (steps_total,)

            def in_index(k):
                return (k, 0)

            def out_index(k):
                return (0, 0)

            out_rows = 8
            dim_sem = (pltpu.ARBITRARY,)
            kernel = _make_mae_kernel(tm, lane, m_rows, None,
                                      need_mask, compute_dt)

        partials = pl.pallas_call(
            kernel,
            out_shape=jax.ShapeDtypeStruct((out_rows, lane), jnp.float32),
            grid_spec=pltpu.PrefetchScalarGridSpec(
                num_scalar_prefetch=0,
                grid=grid,
                in_specs=[
                    pl.BlockSpec((tm, lane), in_index),
                    pl.BlockSpec((tm, lane), in_index),
                ],
                out_specs=pl.BlockSpec((8, lane), out_index),
            ),
            compiler_params=pltpu.CompilerParams(dimension_semantics=dim_sem),
        )(a, b)

        # One final cross-lane/cross-sublane reduce + single divide.
        total = jnp.sum(partials) + tail_sum

    return (total / jnp.float32(n_elem)).astype(out_dt)


if __name__ == "__main__":
    key = jax.random.PRNGKey(0)
    k1, k2 = jax.random.split(key)

    # PyTorch-style NCHW example input shapes.
    shape = (2, 4, 16, 16)
    inpt = jax.random.normal(k1, shape, dtype=jnp.float32)
    tgt = jax.random.normal(k2, shape, dtype=jnp.float32)

    loss = jax.block_until_ready(mae_loss(inpt, tgt))
    ref = jnp.mean(jnp.abs(tgt - inpt))
    assert jnp.allclose(loss, ref, rtol=1e-5, atol=1e-6), (loss, ref)

    # Ragged case: exercises the pl.when-gated edge-block mask and the
    # <128-element tail path (small block_bytes forces multiple row-blocks).
    shape2 = (13, 199)   # 2587 elements = 20 full lane rows + 27-element tail
    k3, k4 = jax.random.split(k2)
    inpt2 = jax.random.normal(k3, shape2, dtype=jnp.float32)
    tgt2 = jax.random.normal(k4, shape2, dtype=jnp.float32)
    loss2 = jax.block_until_ready(mae_loss(inpt2, tgt2, block_bytes=4096))
    ref2 = jnp.mean(jnp.abs(tgt2 - inpt2))
    assert jnp.allclose(loss2, ref2, rtol=1e-5, atol=1e-6), (loss2, ref2)

    print("KERNEL_OK")
</pallas_src>

<mosaic_0001>
module attributes {stable_mosaic.version = 11 : i64} {
  func.func @kernel(%arg0: i32, %arg1: memref<16x128xf32, #tpu.memory_space<vmem>>, %arg2: memref<16x128xf32, #tpu.memory_space<vmem>>, %arg3: memref<8x128xf32, #tpu.memory_space<vmem>>) attributes {dimension_semantics = [#tpu.dimension_semantics<arbitrary>], iteration_bounds = array<i64: 1>, scalar_prefetch = 0 : i64, scratch_operands = 0 : i64, tpu.core_type = #tpu.core_type<tc>, window_params = [{transform_indices = @transform_0, window_bounds = array<i64: 16, 128>}, {transform_indices = @transform_1, window_bounds = array<i64: 16, 128>}, {pipeline_mode = #tpu.pipeline_mode<synchronous>, transform_indices = @transform_2, window_bounds = array<i64: 8, 128>}]} {
    %c0_i32 = arith.constant 0 : i32
    %0 = arith.cmpi eq, %arg0, %c0_i32 : i32
    %1 = arith.extui %0 : i1 to i32
    %c0_i32_0 = arith.constant 0 : i32
    %2 = arith.cmpi ne, %1, %c0_i32_0 : i32
    scf.if %2 {
      %cst_8 = arith.constant 0.000000e+00 : f32
      %12 = vector.broadcast %cst_8 : f32 to vector<8x128xf32>
      %c0_9 = arith.constant 0 : index
      %c0_10 = arith.constant 0 : index
      %13 = vector.load %arg3[%c0_9, %c0_10] : memref<8x128xf32, #tpu.memory_space<vmem>>, vector<8x128xf32>
      tpu.vector_store %arg3[%c0_9, %c0_10], %12 {strides = array<i32>} : memref<8x128xf32, #tpu.memory_space<vmem>>, vector<8x128xf32>,
    } else {
    }
    %c0 = arith.constant 0 : index
    %c0_1 = arith.constant 0 : index
    %3 = vector.load %arg1[%c0, %c0_1] : memref<16x128xf32, #tpu.memory_space<vmem>>, vector<16x128xf32>
    %c0_2 = arith.constant 0 : index
    %c0_3 = arith.constant 0 : index
    %4 = vector.load %arg2[%c0_2, %c0_3] : memref<16x128xf32, #tpu.memory_space<vmem>>, vector<16x128xf32>
    %5 = arith.subf %4, %3 : vector<16x128xf32>
    %6 = math.absf %5 : vector<16x128xf32>
    %c0_4 = arith.constant 0 : index
    %c0_5 = arith.constant 0 : index
    %7 = vector.load %arg3[%c0_4, %c0_5] : memref<8x128xf32, #tpu.memory_space<vmem>>, vector<8x128xf32>
    %8 = vector.shape_cast %6 : vector<16x128xf32> to vector<2x8x128xf32>
    %cst = arith.constant dense<0.000000e+00> : vector<8x128xf32>
    %9 = vector.multi_reduction <add>, %8, %cst [0] : vector<2x8x128xf32> to vector<8x128xf32>
    %10 = arith.addf %7, %9 : vector<8x128xf32>
    %c0_6 = arith.constant 0 : index
    %c0_7 = arith.constant 0 : index
    %11 = vector.load %arg3[%c0_6, %c0_7] : memref<8x128xf32, #tpu.memory_space<vmem>>, vector<8x128xf32>
    tpu.vector_store %arg3[%c0_6, %c0_7], %10 {strides = array<i32>} : memref<8x128xf32, #tpu.memory_space<vmem>>, vector<8x128xf32>,
    return
  }
  func.func @transform_0(%arg0: i32) -> (i32, i32) {
    %c0_i32 = arith.constant 0 : i32
    %c0_i32_0 = arith.constant 0 : i32
    return %arg0, %c0_i32 : i32, i32
  }
  func.func @transform_1(%arg0: i32) -> (i32, i32) {
    %c0_i32 = arith.constant 0 : i32
    %c0_i32_0 = arith.constant 0 : i32
    return %arg0, %c0_i32 : i32, i32
  }
  func.func @transform_2(%arg0: i32) -> (i32, i32) {
    %c0_i32 = arith.constant 0 : i32
    %c0_i32_0 = arith.constant 0 : i32
    %c0_i32_1 = arith.constant 0 : i32
    return %c0_i32, %c0_i32_0 : i32, i32
  }
}

</mosaic_0001>

<llo_original>
// kernel: tpu_custom_call.1
$region0: #{tpu_custom_call.1}
  #allocation0 [shape = 'u32[]', space=smem, size = 0x4, offset = 0x4, fixed_abs, tag = 'smem constant byte address 0x4 - core index']
  #allocation1 [shape = 'u32[144,128]{1,0:T(1,128)}', space=vmem, size = 0x12000, scoped, tag = 'internal scratch']
  %s0 = inlined_call_operand.hbm [shape: f32[16,128], index: 0, kind: input, shape index: {}]
  %s1 = inlined_call_operand.hbm [shape: f32[16,128], index: 1, kind: input, shape index: {}]
  %s2 = inlined_call_operand.hbm [shape: f32[8,128], index: 2, kind: output, shape index: {}]
  %s3 = sld [smem:[#allocation0]]
  $region30: #{tpu_custom_call.1} parent=0
    _
  %s5 = ssub.s32 1, %s3
  %s6 = scalar_select 0, %s5, %s3
  $region1: #{tpu_custom_call.1} parent=0
    #allocation2 [shape = 'u8[8192]{0}', space=vmem, size = 0x2000, scoped, tag = 'input window, operand 0, single buffered']
    #allocation3 [shape = 's32[1]{0}', space=sflag, size = 0x4, scoped, tag = 'scoped memory for tpu_custom_call.1']
    #allocation4 [shape = 's32[1]{0}', space=sflag, size = 0x4, scoped, tag = 'scoped memory for tpu_custom_call.1']
    #allocation5 [shape = 'u8[8192]{0}', space=vmem, size = 0x2000, scoped, tag = 'input window, operand 1, single buffered']
    #allocation6 [shape = 's32[1]{0}', space=sflag, size = 0x4, scoped, tag = 'scoped memory for tpu_custom_call.1']
    #allocation7 [shape = 'u8[4096]{0}', space=vmem, size = 0x1000, scoped, tag = 'output window, operand 0, single buffered']
    %7 = vsyncpa [#allocation3], 0
    %8 = vsyncpa [#allocation6], 0
    %9 = vsyncpa [#allocation4], 0
    // Predicated region
    $region2: #{tpu_custom_call.1} parent=1 // pred_check
      _
    $region3: #{tpu_custom_call.1} parent=1 // pred_check_branch
      %11 = sbr.rel (0) target = $region5
    $region4: #{tpu_custom_call.1} parent=1 // pred_region
      %s13 = ssub.s32 256, 256
      %14 = vsyncadd [#allocation3], %s13
      %s15 = sshll.u32 [#allocation2], 4
      %s16 = int_to_ptr.vmem [resolvable:$true] %s15
      %21 = dma.hbm_to_vmem [thread:$0]  %s0, 256, %s16, [#allocation3], 128, 128, 8
    $region5: #{tpu_custom_call.1} parent=1 // pred_fallthru
      _
    // Predicated region
    $region6: #{tpu_custom_call.1} parent=1 // pred_check
      _
    $region7: #{tpu_custom_call.1} parent=1 // pred_check_branch
      %23 = sbr.rel (0) target = $region9
    $region8: #{tpu_custom_call.1} parent=1 // pred_region
      %s25 = ssub.s32 256, 256
      %26 = vsyncadd [#allocation6], %s25
      %s27 = sshll.u32 [#allocation5], 4
      %s28 = int_to_ptr.vmem [resolvable:$true] %s27
      %33 = dma.hbm_to_vmem [thread:$0]  %s1, 256, %s28, [#allocation6], 128, 128, 8
    $region9: #{tpu_custom_call.1} parent=1 // pred_fallthru
      _
    // Predicated region
    $region10: #{tpu_custom_call.1} parent=1 // pred_check
      _
    $region11: #{tpu_custom_call.1} parent=1 // pred_check_branch
      %35 = sbr.rel (0) target = $region13
    $region12: #{tpu_custom_call.1} parent=1 // pred_region
      %36 = dma.done [#allocation3], 256
    $region13: #{tpu_custom_call.1} parent=1 // pred_fallthru
      _
    // Predicated region
    $region14: #{tpu_custom_call.1} parent=1 // pred_check
      _
    $region15: #{tpu_custom_call.1} parent=1 // pred_check_branch
      %38 = sbr.rel (0) target = $region17
    $region16: #{tpu_custom_call.1} parent=1 // pred_region
      %39 = dma.done [#allocation6], 256
    $region17: #{tpu_custom_call.1} parent=1 // pred_fallthru
      _
    %p40 = scmp.eq.s32.totalorder 0, 0
    // Predicated region
    $region18: #{tpu_custom_call.1} parent=1 // pred_check
      %p41 = pneg %p40
    $region19: #{tpu_custom_call.1} parent=1 // pred_check_branch
      %43 = sbr.rel (%p41) target = $region21
    $region20: #{tpu_custom_call.1} parent=1 // pred_region
      %44 = vst [vmem:[#allocation7] sm:$0xff] 0.0
    $region21: #{tpu_custom_call.1} parent=1 // pred_fallthru
      _
    %v45 = vld [vmem:[#allocation2] sm:$0xff]
    %v46 = vld [vmem:[#allocation2 + $0x8] sm:$0xff]
    %v47 = vld [vmem:[#allocation5] sm:$0xff]
    %v48 = vld [vmem:[#allocation5 + $0x8] sm:$0xff]
    %v49 = vsub.f32 %v47, %v45
    %v50 = vsub.f32 %v48, %v46
    %v51 = vand.u32 2147483647, %v49
    %v52 = vand.u32 2147483647, %v50
    %v53 = vld [vmem:[#allocation7] sm:$0xff]
    %v54 = vadd.f32 %v51, %v52
    %v55 = vadd.f32 %v53, %v54
    %56 = vst [vmem:[#allocation7] sm:$0xff] %v55
    // Predicated region
    $region22: #{tpu_custom_call.1} parent=1 // pred_check
      _
    $region23: #{tpu_custom_call.1} parent=1 // pred_check_branch
      %58 = sbr.rel (0) target = $region25
    $region24: #{tpu_custom_call.1} parent=1 // pred_region
      %s60 = ssub.s32 128, 128
      %61 = vsyncadd [#allocation4], %s60
      %s63 = sshll.u32 [#allocation7], 4
      %s64 = int_to_ptr.vmem [resolvable:$true] %s63
      %66 = dma.vmem_to_hbm [thread:$0]  %s64, 128, %s2, [#allocation4]
    $region25: #{tpu_custom_call.1} parent=1 // pred_fallthru
      _
    // Predicated region
    $region26: #{tpu_custom_call.1} parent=1 // pred_check
      _
    $region27: #{tpu_custom_call.1} parent=1 // pred_check_branch
      %68 = sbr.rel (0) target = $region29
    $region28: #{tpu_custom_call.1} parent=1 // pred_region
      %69 = dma.done [#allocation4], 128
    $region29: #{tpu_custom_call.1} parent=1 // pred_fallthru
      _
    %70 = vsyncpa [#allocation3], 1
    %71 = vsyncpa [#allocation6], 1
    %72 = vsyncpa [#allocation4], 1

</llo_original>
